<compile_context>
chip_gen: v7x
topology: tpu7x:2x2x1
jax: 0.10.0
libtpu: 0.0.40
codegen_flags: <defaults>
</compile_context>

<pallas_src>
import functools

import jax
import jax.numpy as jnp
from jax import lax
from jax.experimental import pallas as pl
from jax.experimental.pallas import tpu as pltpu

# v7x-safe scoped VMEM budget (<64 MiB physical); comfortable on v5e/v6e too.
_VMEM_LIMIT_BYTES = 48 * 1024 * 1024


def _round_up(x, m):
    return ((x + m - 1) // m) * m


def _linear_single_k_kernel(x_ref, wt_ref, b_ref, o_ref, *, precision):
    # Whole reduction in one step: direct dot + bias + store.  No zero-init,
    # no accumulation phases, no scratch.
    o_ref[...] = (
        jnp.dot(x_ref[...], wt_ref[...], precision=precision,
                preferred_element_type=jnp.float32)
        + b_ref[...]
    ).astype(o_ref.dtype)


def _linear_multi_k_kernel(x_ref, wt_ref, b_ref, o_ref, *, precision):
    # Grid: (i over M tiles, j over N tiles, k over K tiles); k is the
    # reduction axis (innermost, "arbitrary").  The f32 output block index
    # depends only on (i, j), so it stays resident in VMEM across k and we
    # accumulate directly into it.
    k = pl.program_id(2)

    @pl.when(k == 0)
    def _init():
        o_ref[...] = jnp.zeros_like(o_ref)

    # x_ref: (tm, tk), wt_ref: (tk, tn) -- W was transposed once outside.
    o_ref[...] += jnp.dot(x_ref[...], wt_ref[...], precision=precision,
                          preferred_element_type=jnp.float32)

    @pl.when(k == pl.num_programs(2) - 1)
    def _finalize():
        # Bias BlockSpec indexes only on j, so it is fetched once per (i, j).
        o_ref[...] += b_ref[...]


def prepare_decoder_params(weight, bias, *, tn=512, tk=None,
                           vmem_limit_bytes=_VMEM_LIMIT_BYTES):
    """One-time parameter preparation (call at init, NOT per forward pass).

    weight: (N, K) float32, PyTorch (output_features, input_features) layout.
    bias:   (N,)   float32.

    Transposes the weight to (K, N) and zero-pads weight/bias to tile-aligned
    sizes once, so the per-call forward never pads or transposes parameters.
    """
    N, K = weight.shape
    assert bias.shape == (N,)
    assert weight.dtype == jnp.float32 and bias.dtype == jnp.float32, (
        "kernel accumulates directly in the f32 output block; only float32 "
        "parameters are supported")
    # TODO(synk): a bf16-input variant would need a separate f32 scratch
    # accumulator and dtype-dependent sublane multiples (16 for bf16).

    tn = min(tn, _round_up(N, 128))
    Np = _round_up(N, tn)

    if tk is None:
        # Use a full-K block when the double-buffered X / W^T tiles fit the
        # VMEM budget: removes K padding of the activation entirely and
        # collapses the reduction loop to a single step.
        full_k_bytes = 2 * (512 + tn) * K * 4      # conservative (tm <= 512)
        tk = K if full_k_bytes <= vmem_limit_bytes // 2 else 512
    if tk != K:
        tk = _round_up(min(tk, _round_up(K, 128)), 128)
    Kp = K if tk == K else _round_up(K, tk)

    wt = weight.T                                   # (K, N) -- once per model
    if (Kp, Np) != (K, N):
        wt = jnp.pad(wt, ((0, Kp - K), (0, Np - N)))
    bp = bias if Np == N else jnp.pad(bias, (0, Np - N))
    bp = bp.reshape(1, Np)

    return {"wt": wt, "b": bp, "N": N, "K": K, "Np": Np, "Kp": Kp,
            "tn": tn, "tk": tk}


def decoder_forward(x, params, *, tm=512, precision=None,
                    vmem_limit_bytes=_VMEM_LIMIT_BYTES):
    """Pallas equivalent of Decoder.forward: X @ W.t() + b.

    x:      (M, K) float32
    params: output of prepare_decoder_params (pre-transposed / pre-padded).
    returns (M, N) float32
    """
    M, K = x.shape
    assert K == params["K"], "x inner dim must match weight inner dim"
    assert x.dtype == jnp.float32, "float32 activations only"

    N, Np, Kp = params["N"], params["Np"], params["Kp"]
    tn, tk = params["tn"], params["tk"]
    wt, bp = params["wt"], params["b"]

    tm = min(tm, _round_up(M, 8))            # f32 sublane multiple is 8
    Mp = _round_up(M, tm)

    xp = x
    if (Mp, Kp) != (M, K):
        xp = jnp.pad(x, ((0, Mp - M), (0, Kp - K)))

    grid_m, grid_n, grid_k = Mp // tm, Np // tn, Kp // tk

    # X is re-read once per N tile, W^T once per M tile (re-streaming counted).
    cost = pl.CostEstimate(
        flops=2 * Mp * Np * Kp,
        transcendentals=0,
        bytes_accessed=4 * (Mp * Kp * grid_n + Kp * Np * grid_m
                            + Np + Mp * Np),
    )

    if grid_k == 1:
        # Single reduction step: no accumulation machinery at all.  This is
        # the path taken at the deployment shape and whenever tk == K.
        # Note (v7x): with grid (1, 1) one TensorCore idles -- acceptable,
        # since the tiny shape should be fused into the caller anyway.
        out_padded = pl.pallas_call(
            functools.partial(_linear_single_k_kernel, precision=precision),
            out_shape=jax.ShapeDtypeStruct((Mp, Np), jnp.float32),
            grid=(grid_m, grid_n),
            in_specs=[
                pl.BlockSpec((tm, Kp), lambda i, j: (i, 0)),   # X tile
                pl.BlockSpec((Kp, tn), lambda i, j: (0, j)),   # W^T tile
                pl.BlockSpec((1, tn), lambda i, j: (0, j)),    # bias (j only)
            ],
            out_specs=pl.BlockSpec((tm, tn), lambda i, j: (i, j)),
            compiler_params=pltpu.CompilerParams(
                dimension_semantics=("parallel", "parallel"),
                vmem_limit_bytes=vmem_limit_bytes,
            ),
            cost_estimate=cost,
        )(xp, wt, bp)
    else:
        out_padded = pl.pallas_call(
            functools.partial(_linear_multi_k_kernel, precision=precision),
            out_shape=jax.ShapeDtypeStruct((Mp, Np), jnp.float32),
            grid=(grid_m, grid_n, grid_k),
            in_specs=[
                pl.BlockSpec((tm, tk), lambda i, j, k: (i, k)),  # X tile
                pl.BlockSpec((tk, tn), lambda i, j, k: (k, j)),  # W^T tile
                pl.BlockSpec((1, tn), lambda i, j, k: (0, j)),   # bias (j only)
            ],
            out_specs=pl.BlockSpec((tm, tn), lambda i, j, k: (i, j)),
            compiler_params=pltpu.CompilerParams(
                dimension_semantics=("parallel", "parallel", "arbitrary"),
                vmem_limit_bytes=vmem_limit_bytes,
            ),
            cost_estimate=cost,
        )(xp, wt, bp)

    if (Mp, Np) != (M, N):
        return out_padded[:M, :N]
    return out_padded


def decoder_apply(x, weight, bias, **kwargs):
    """Convenience: prepare params + forward in one call (tests / one-offs)."""
    params = prepare_decoder_params(weight, bias,
                                    tn=kwargs.pop("tn", 512),
                                    tk=kwargs.pop("tk", None))
    return decoder_forward(x, params, **kwargs)


if __name__ == "__main__":
    key = jax.random.PRNGKey(0)

    # --- Primary check: module-consistent shapes (batch=8, in=32, out=16).
    # TODO(synk): at this shape, fuse the linear into the surrounding kernel
    # instead of a standalone pallas_call (pure launch overhead here).
    M, K, N = 8, 32, 16
    kx, kw, kb = jax.random.split(key, 3)
    x = jax.random.uniform(kx, (M, K), dtype=jnp.float32)       # torch.rand-like
    weight = jax.random.uniform(kw, (N, K), dtype=jnp.float32)  # (out, in)
    bias = jax.random.uniform(kb, (N,), dtype=jnp.float32)

    params = prepare_decoder_params(weight, bias)   # once, at "init" time
    out = jax.block_until_ready(decoder_forward(x, params))
    ref = x @ weight.T + bias
    assert out.shape == (M, N)
    assert jnp.allclose(out, ref, atol=1e-5, rtol=1e-5), "small-shape mismatch"

    # --- Secondary check: force the multi-K accumulate-in-output path
    # (grid (2, 2, 3) with M/N/K padding) using small explicit tiles.
    M2, K2, N2 = 16, 300, 200
    k2x, k2w, k2b = jax.random.split(jax.random.PRNGKey(1), 3)
    x2 = jax.random.uniform(k2x, (M2, K2), dtype=jnp.float32)
    w2 = jax.random.uniform(k2w, (N2, K2), dtype=jnp.float32)
    b2 = jax.random.uniform(k2b, (N2,), dtype=jnp.float32)

    params2 = prepare_decoder_params(w2, b2, tn=128, tk=128)
    out2 = jax.block_until_ready(decoder_forward(x2, params2, tm=8))
    ref2 = lax.dot_general(
        x2, w2, (((1,), (1,)), ((), ())),
        precision=lax.Precision.HIGHEST,
        preferred_element_type=jnp.float32) + b2
    assert out2.shape == (M2, N2)
    assert jnp.allclose(out2, ref2, atol=1e-3, rtol=1e-3), "multi-K mismatch"

    # --- Tertiary check: auto tile selection -> full-K single-step kernel
    # with M/N padding and output slice-back.
    M3, K3, N3 = 200, 96, 300
    k3x, k3w, k3b = jax.random.split(jax.random.PRNGKey(2), 3)
    x3 = jax.random.uniform(k3x, (M3, K3), dtype=jnp.float32)
    w3 = jax.random.uniform(k3w, (N3, K3), dtype=jnp.float32)
    b3 = jax.random.uniform(k3b, (N3,), dtype=jnp.float32)

    out3 = jax.block_until_ready(decoder_apply(x3, w3, b3))
    ref3 = x3 @ w3.T + b3
    assert out3.shape == (M3, N3)
    assert jnp.allclose(out3, ref3, atol=1e-3, rtol=1e-3), "full-K mismatch"

    print("KERNEL_OK")
</pallas_src>

<mosaic_0001>
module attributes {stable_mosaic.version = 11 : i64} {
  func.func @_linear_single_k_kernel(%arg0: i32, %arg1: i32, %arg2: memref<8x32xf32, #tpu.memory_space<vmem>>, %arg3: memref<32x128xf32, #tpu.memory_space<vmem>>, %arg4: memref<1x128xf32, #tpu.memory_space<vmem>>, %arg5: memref<8x128xf32, #tpu.memory_space<vmem>>) attributes {dimension_semantics = [#tpu.dimension_semantics<parallel>, #tpu.dimension_semantics<parallel>], iteration_bounds = array<i64: 1, 1>, scalar_prefetch = 0 : i64, scratch_operands = 0 : i64, tpu.core_type = #tpu.core_type<tc>, window_params = [{transform_indices = @transform_0, window_bounds = array<i64: 8, 32>}, {transform_indices = @transform_1, window_bounds = array<i64: 32, 128>}, {transform_indices = @transform_2, window_bounds = array<i64: 1, 128>}, {transform_indices = @transform_3, window_bounds = array<i64: 8, 128>}]} {
    %c0 = arith.constant 0 : index
    %c0_0 = arith.constant 0 : index
    %0 = vector.load %arg2[%c0, %c0_0] : memref<8x32xf32, #tpu.memory_space<vmem>>, vector<8x32xf32>
    %c0_1 = arith.constant 0 : index
    %c0_2 = arith.constant 0 : index
    %1 = vector.load %arg3[%c0_1, %c0_2] : memref<32x128xf32, #tpu.memory_space<vmem>>, vector<32x128xf32>
    %cst = arith.constant dense<0.000000e+00> : vector<8x128xf32>
    %2 = tpu.matmul %0, %1, %cst {dimension_numbers = #tpu.dot_dimension_numbers<[1], [0], [0], [1], [0, 0, 1, 1], [], []>} : vector<8x32xf32>, vector<32x128xf32>, vector<8x128xf32> -> vector<8x128xf32>
    %c0_3 = arith.constant 0 : index
    %c0_4 = arith.constant 0 : index
    %3 = vector.load %arg4[%c0_3, %c0_4] : memref<1x128xf32, #tpu.memory_space<vmem>>, vector<1x128xf32>
    %4 = vector.broadcast %3 : vector<1x128xf32> to vector<8x128xf32>
    %5 = arith.addf %2, %4 : vector<8x128xf32>
    %c0_5 = arith.constant 0 : index
    %c0_6 = arith.constant 0 : index
    %6 = vector.load %arg5[%c0_5, %c0_6] : memref<8x128xf32, #tpu.memory_space<vmem>>, vector<8x128xf32>
    tpu.vector_store %arg5[%c0_5, %c0_6], %5 {strides = array<i32>} : memref<8x128xf32, #tpu.memory_space<vmem>>, vector<8x128xf32>,
    return
  }
  func.func @transform_0(%arg0: i32, %arg1: i32) -> (i32, i32) {
    %c0_i32 = arith.constant 0 : i32
    %c0_i32_0 = arith.constant 0 : i32
    return %arg0, %c0_i32 : i32, i32
  }
  func.func @transform_1(%arg0: i32, %arg1: i32) -> (i32, i32) {
    %c0_i32 = arith.constant 0 : i32
    %c0_i32_0 = arith.constant 0 : i32
    return %c0_i32, %arg1 : i32, i32
  }
  func.func @transform_2(%arg0: i32, %arg1: i32) -> (i32, i32) {
    %c0_i32 = arith.constant 0 : i32
    %c0_i32_0 = arith.constant 0 : i32
    return %c0_i32, %arg1 : i32, i32
  }
  func.func @transform_3(%arg0: i32, %arg1: i32) -> (i32, i32) {
    %c0_i32 = arith.constant 0 : i32
    return %arg0, %arg1 : i32, i32
  }
}

</mosaic_0001>

<llo_original>
// kernel: tpu_custom_call.1
$region0: #{tpu_custom_call.1}
  #allocation0 [shape = 'u32[]', space=smem, size = 0x4, offset = 0x4, fixed_abs, tag = 'smem constant byte address 0x4 - core index']
  #allocation1 [shape = 'u32[144,128]{1,0:T(1,128)}', space=vmem, size = 0x12000, scoped, tag = 'internal scratch']
  %s0 = inlined_call_operand.hbm [shape: f32[8,32], index: 0, kind: input, shape index: {}]
  %s1 = inlined_call_operand.hbm [shape: f32[32,128], index: 1, kind: input, shape index: {}]
  %s2 = inlined_call_operand.vmem [shape: f32[1,128], index: 2, kind: input, shape index: {}]
  %s3 = inlined_call_operand.hbm [shape: f32[8,128], index: 3, kind: output, shape index: {}]
  %s4 = sld [smem:[#allocation0]]
  $region30: #{tpu_custom_call.1} parent=0
    _
  %s6 = ssub.s32 1, %s4
  %s7 = scalar_select 0, %s6, %s4
  $region1: #{tpu_custom_call.1} parent=0
    #allocation2 [shape = 'u8[4096]{0}', space=vmem, size = 0x1000, scoped, tag = 'input window, operand 0, single buffered']
    #allocation3 [shape = 's32[1]{0}', space=sflag, size = 0x4, scoped, tag = 'scoped memory for tpu_custom_call.1']
    #allocation4 [shape = 's32[1]{0}', space=sflag, size = 0x4, scoped, tag = 'scoped memory for tpu_custom_call.1']
    #allocation5 [shape = 'u8[16384]{0}', space=vmem, size = 0x4000, scoped, tag = 'input window, operand 1, single buffered']
    #allocation6 [shape = 's32[1]{0}', space=sflag, size = 0x4, scoped, tag = 'scoped memory for tpu_custom_call.1']
    #allocation7 [shape = 'u8[4096]{0}', space=vmem, size = 0x1000, scoped, tag = 'output window, operand 0, single buffered']
    %8 = vsyncpa [#allocation3], 0
    %9 = vsyncpa [#allocation6], 0
    %10 = vsyncpa [#allocation4], 0
    // Predicated region
    $region2: #{tpu_custom_call.1} parent=1 // pred_check
      _
    $region3: #{tpu_custom_call.1} parent=1 // pred_check_branch
      %12 = sbr.rel (0) target = $region5
    $region4: #{tpu_custom_call.1} parent=1 // pred_region
      %s14 = ssub.s32 128, 128
      %15 = vsyncadd [#allocation3], %s14
      %s17 = sshll.u32 [#allocation2], 4
      %s18 = int_to_ptr.vmem [resolvable:$true] %s17
      %20 = dma.hbm_to_vmem [thread:$0]  %s0, 128, %s18, [#allocation3]
    $region5: #{tpu_custom_call.1} parent=1 // pred_fallthru
      _
    // Predicated region
    $region6: #{tpu_custom_call.1} parent=1 // pred_check
      _
    $region7: #{tpu_custom_call.1} parent=1 // pred_check_branch
      %22 = sbr.rel (0) target = $region9
    $region8: #{tpu_custom_call.1} parent=1 // pred_region
      %s24 = ssub.s32 512, 512
      %25 = vsyncadd [#allocation6], %s24
      %s26 = sshll.u32 [#allocation5], 4
      %s27 = int_to_ptr.vmem [resolvable:$true] %s26
      %32 = dma.hbm_to_vmem [thread:$0]  %s1, 512, %s27, [#allocation6], 128, 128, 8
    $region9: #{tpu_custom_call.1} parent=1 // pred_fallthru
      _
    // Predicated region
    $region10: #{tpu_custom_call.1} parent=1 // pred_check
      _
    $region11: #{tpu_custom_call.1} parent=1 // pred_check_branch
      %34 = sbr.rel (0) target = $region13
    $region12: #{tpu_custom_call.1} parent=1 // pred_region
      _
    $region13: #{tpu_custom_call.1} parent=1 // pred_fallthru
      _
    // Predicated region
    $region14: #{tpu_custom_call.1} parent=1 // pred_check
      _
    $region15: #{tpu_custom_call.1} parent=1 // pred_check_branch
      %36 = sbr.rel (0) target = $region17
    $region16: #{tpu_custom_call.1} parent=1 // pred_region
      %37 = dma.done [#allocation3], 128
    $region17: #{tpu_custom_call.1} parent=1 // pred_fallthru
      _
    // Predicated region
    $region18: #{tpu_custom_call.1} parent=1 // pred_check
      _
    $region19: #{tpu_custom_call.1} parent=1 // pred_check_branch
      %39 = sbr.rel (0) target = $region21
    $region20: #{tpu_custom_call.1} parent=1 // pred_region
      %40 = dma.done [#allocation6], 512
    $region21: #{tpu_custom_call.1} parent=1 // pred_fallthru
      _
    %v41 = vld [vmem:[#allocation2] sm:$0xff]
    %v42 = vld [vmem:[#allocation5] sm:$0xff]
    %v43 = vld [vmem:[#allocation5 + $0x8] sm:$0xff]
    %v44 = vld [vmem:[#allocation5 + $0x10] sm:$0xff]
    %v45 = vld [vmem:[#allocation5 + $0x18] sm:$0xff]
    %v46 = vld [vmem:[%s2] sm:$0x1]
    %v48 = vlaneseq
    %v49 = vshrl.u32 %v48, 7
    %v50 = vsub.s32 0, %v49
    %v51 = vrot.slane %v46, %v50
    %vm53 = vcmask 261120
    %v55 = vsel %vm53, %v41, 0
    %57 = vmatprep.subr.mxu0 0.0
    %58 = vmatpush1.msra.mxu0 %v42
    %59 = vmatprep.subr.mxu0 0.0
    %60 = vmatpush1.msra.mxu0 %v43
    %61 = vmatprep.subr.mxu0 0.0
    %62 = vmatpush1.msra.mxu0 %v44
    %63 = vmatprep.subr.mxu0 0.0
    %64 = vmatpush1.msra.mxu0 %v45
    %65 = vmatprep.subr.mxu0 0.0
    %66 = vmatpush1.msra.mxu0 0.0
    %67 = vmatprep.subr.mxu0 0.0
    %68 = vmatpush1.msra.mxu0 0.0
    %69 = vmatprep.subr.mxu0 0.0
    %70 = vmatpush1.msra.mxu0 0.0
    %71 = vmatprep.subr.mxu0 0.0
    %72 = vmatpush1.msra.mxu0 0.0
    %73 = vmatprep.subr.mxu0 0.0
    %74 = vmatpush1.msra.mxu0 0.0
    %75 = vmatprep.subr.mxu0 0.0
    %76 = vmatpush1.msra.mxu0 0.0
    %77 = vmatprep.subr.mxu0 0.0
    %78 = vmatpush1.msra.mxu0 0.0
    %79 = vmatprep.subr.mxu0 0.0
    %80 = vmatpush1.msra.mxu0 0.0
    %81 = vmatprep.subr.mxu0 0.0
    %82 = vmatpush1.msra.mxu0 0.0
    %83 = vmatprep.subr.mxu0 0.0
    %84 = vmatpush1.msra.mxu0 0.0
    %85 = vmatprep.subr.mxu0 0.0
    %86 = vmatpush1.msra.mxu0 0.0
    %87 = vmatprep.subr.mxu0 0.0
    %88 = vmatpush1.msra.mxu0 0.0
    %89 = vmatprep.subr.mxu0 0.0
    %90 = vmatpush1.msra.mxu0 0.0
    %91 = vmatprep.subr.mxu0 0.0
    %92 = vmatpush1.msra.mxu0 0.0
    %93 = vmatprep.subr.mxu0 0.0
    %94 = vmatpush1.msra.mxu0 0.0
    %95 = vmatprep.subr.mxu0 0.0
    %96 = vmatpush1.msra.mxu0 0.0
    %97 = vmatprep.subr.mxu0 0.0
    %98 = vmatpush1.msra.mxu0 0.0
    %99 = vmatprep.subr.mxu0 0.0
    %100 = vmatpush1.msra.mxu0 0.0
    %101 = vmatprep.subr.mxu0 0.0
    %102 = vmatpush1.msra.mxu0 0.0
    %103 = vmatprep.subr.mxu0 0.0
    %104 = vmatpush1.msra.mxu0 0.0
    %105 = vmatprep.subr.mxu0 0.0
    %106 = vmatpush1.msra.mxu0 0.0
    %107 = vmatprep.subr.mxu0 0.0
    %108 = vmatpush1.msra.mxu0 0.0
    %109 = vmatprep.subr.mxu0 0.0
    %110 = vmatpush1.msra.mxu0 0.0
    %111 = vmatprep.subr.mxu0 0.0
    %112 = vmatpush1.msra.mxu0 0.0
    %113 = vmatprep.subr.mxu0 0.0
    %114 = vmatpush1.msra.mxu0 0.0
    %115 = vmatprep.subr.mxu0 0.0
    %116 = vmatpush1.msra.mxu0 0.0
    %117 = vmatprep.subr.mxu0 0.0
    %118 = vmatpush1.msra.mxu0 0.0
    %119 = vmatprep.subr.mxu0 0.0
    %120 = vmatpush1.msra.mxu0 0.0
    %121 = vmatprep.mubr.f32.mxu0 0.0
    %122 = vmatmul.mubr.f32.gmra.mrb[0].mxu0 %v55
    %v123 = vpop.f32.mrb[0].mxu0
    %v124 = vadd.f32 %v51, %v123
    %v125 = vpop.f32.mrb[0].mxu0
    %126 = vdwg.mxu0
    %127 = vst [vmem:[#allocation7] sm:$0xff] %v124
    // Predicated region
    $region22: #{tpu_custom_call.1} parent=1 // pred_check
      _
    $region23: #{tpu_custom_call.1} parent=1 // pred_check_branch
      %129 = sbr.rel (0) target = $region25
    $region24: #{tpu_custom_call.1} parent=1 // pred_region
      %s131 = ssub.s32 128, 128
      %132 = vsyncadd [#allocation4], %s131
      %s134 = sshll.u32 [#allocation7], 4
      %s135 = int_to_ptr.vmem [resolvable:$true] %s134
      %137 = dma.vmem_to_hbm [thread:$0]  %s135, 128, %s3, [#allocation4]
    $region25: #{tpu_custom_call.1} parent=1 // pred_fallthru
      _
    // Predicated region
    $region26: #{tpu_custom_call.1} parent=1 // pred_check
      _
    $region27: #{tpu_custom_call.1} parent=1 // pred_check_branch
      %139 = sbr.rel (0) target = $region29
    $region28: #{tpu_custom_call.1} parent=1 // pred_region
      %140 = dma.done [#allocation4], 128
    $region29: #{tpu_custom_call.1} parent=1 // pred_fallthru
      _
    %141 = vsyncpa [#allocation3], 1
    %142 = vsyncpa [#allocation6], 1
    %143 = vsyncpa [#allocation4], 1

</llo_original>
